<compile_context>
chip_gen: v7x
topology: tpu7x:2x2x1
jax: 0.10.0
libtpu: 0.0.40
codegen_flags: <defaults>
</compile_context>

<pallas_src>
import math

import jax
import jax.numpy as jnp
from jax import lax
from jax.experimental import pallas as pl
from jax.experimental.pallas import tpu as pltpu


def _round_up(x: int, m: int) -> int:
    return ((x + m - 1) // m) * m


def _cdiv(a: int, b: int) -> int:
    return -(-a // b)


def _sublane_multiple(dtype) -> int:
    # f32 -> 8, bf16/f16 -> 16, int8/fp8 -> 32 (sub-32-bit dtypes pack on sublanes).
    return max(8, 32 // jnp.dtype(dtype).itemsize)


def _split_dim(size: int, cap: int, align: int):
    """Pick a tile <= cap (multiple of `align`) and the padded extent it divides."""
    padded = _round_up(size, align)
    if padded <= cap:
        return padded, padded
    nblocks = _cdiv(padded, cap)
    tile = _round_up(_cdiv(padded, nblocks), align)
    return tile, tile * nblocks


def _vmem_budget():
    """(scoped-VMEM bytes we are willing to request, physical VMEM bytes)."""
    try:
        phys = int(pltpu.get_tpu_info().vmem_capacity_bytes)
    except Exception:
        phys = 128 << 20
    if phys <= (64 << 20):          # v7x-class: 64 MiB per TensorCore
        return 48 << 20, phys       # leave headroom for compiler internal scratch
    return 100 << 20, phys          # v5e / v6e: 128 MiB physical


# ------------------------------- kernels -------------------------------------


def _linear_resident_kernel(x_ref, w_ref, b_ref, o_ref):
    # x_ref: (tm, Kp) activations, resident across the inner N axis
    # w_ref: (Np, Kp) whole padded weight in native [N, K] layout (fetched once)
    # b_ref: (1,  tn) bias
    # o_ref: (tm, tn) output tile
    j = pl.program_id(1)
    tn = o_ref.shape[1]
    row0 = pl.multiple_of(j * tn, 128)
    w_tile = w_ref[pl.ds(row0, tn), :]                       # (tn, Kp) VMEM view
    acc = lax.dot_general(
        x_ref[...], w_tile,
        dimension_numbers=(((1,), (1,)), ((), ())),          # x @ W^T on the MXU
        preferred_element_type=jnp.float32,
    )
    o_ref[...] = (acc + b_ref[...].astype(jnp.float32)).astype(o_ref.dtype)


def _linear_stream_kernel(x_ref, w_ref, b_ref, o_ref, acc_ref):
    # x_ref: (tm, tk); w_ref: (tn, tk) native-layout weight tile; b_ref: (1, tn)
    # o_ref: (tm, tn); acc_ref: (tm, tn) f32 scratch, persistent across the K axis.
    k = pl.program_id(2)

    @pl.when(k == 0)
    def _():
        acc_ref[...] = jnp.zeros_like(acc_ref)

    acc_ref[...] += lax.dot_general(
        x_ref[...], w_ref[...],
        dimension_numbers=(((1,), (1,)), ((), ())),          # x @ W^T on the MXU
        preferred_element_type=jnp.float32,
    )

    @pl.when(k == pl.num_programs(2) - 1)
    def _():
        o_ref[...] = (
            acc_ref[...] + b_ref[...].astype(jnp.float32)
        ).astype(o_ref.dtype)


# ------------------------------- wrapper --------------------------------------


def simple_linear(x, weight, bias=None, *, force_stream=False):
    """y = x @ weight.T + bias  (PyTorch nn.functional.linear semantics).

    x:      [..., in_features]
    weight: [out_features, in_features]  (native layout, never transposed in HBM)
    bias:   [out_features] or None (SimpleLinear always owns a bias parameter,
            initialized to zeros; None is treated as zeros)
    """
    orig_shape = x.shape
    K = orig_shape[-1]
    N, Kw = weight.shape
    assert Kw == K, "weight must be [out_features, in_features]"

    x2d = x.reshape(-1, K)
    M = x2d.shape[0]

    # ---- tiny-shape fast path: padding to (8,128) tiles would dominate ------
    if K < 128 or N < 128 or M < 8:
        y = lax.dot_general(
            x2d, weight, dimension_numbers=(((1,), (1,)), ((), ())),
            preferred_element_type=jnp.float32)
        if bias is not None:
            y = y + bias.astype(jnp.float32)
        return y.astype(x.dtype).reshape(*orig_shape[:-1], N)

    dt = x.dtype
    itemsize = jnp.dtype(dt).itemsize
    sub = _sublane_multiple(dt)
    budget, phys_vmem = _vmem_budget()

    bias_arr = bias if bias is not None else jnp.zeros((N,), dtype=jnp.float32)
    b_itemsize = jnp.dtype(bias_arr.dtype).itemsize

    # ---- tile selection ------------------------------------------------------
    tm, Mp = _split_dim(M, 512, sub)
    tn, Np = _split_dim(N, 512, 128)

    # Guarantee >=2 blocks along a parallel axis when M fits a single block so
    # both v7x TensorCores (megacore on other generations) get work.
    if Mp == tm and Np == tn and Np >= 256:
        tn = (Np // 2) if (Np // 2) % 128 == 0 else 128

    Kp128 = _round_up(K, 128)

    # ---- regime selection: whole-weight-resident vs. K-streaming -------------
    resident_weight_cap = (8 << 20) if phys_vmem <= (64 << 20) else (16 << 20)
    resident = (not force_stream) and (Np * Kp128 * itemsize <= resident_weight_cap)

    if resident:
        Kp = Kp128

        def _need_res(tm_):
            return (2 * tm_ * Kp * itemsize      # x (double-buffered)
                    + 2 * Np * Kp * itemsize     # whole weight (double-buffered)
                    + 2 * tm_ * tn * itemsize    # output
                    + 2 * tn * b_itemsize)       # bias

        cap = 512
        while _need_res(tm) > budget and cap > sub:
            cap = max(sub, cap // 2)
            tm, Mp = _split_dim(M, cap, sub)
        resident = _need_res(tm) <= budget

    if not resident:
        tm, Mp = _split_dim(M, 512, sub)         # undo any resident-path shrink
        tk, Kp = _split_dim(K, 1024, 128)

    # ---- pad operands only when needed (no weight transpose, ever) ----------
    if (Mp, Kp) != (M, K):
        x2d = jnp.pad(x2d, ((0, Mp - M), (0, Kp - K)))
    w2d = weight
    if (Np, Kp) != (N, K):
        w2d = jnp.pad(w2d, ((0, Np - N), (0, Kp - K)))
    b2d = bias_arr.reshape(1, N)
    if Np != N:
        b2d = jnp.pad(b2d, ((0, 0), (0, Np - N)))

    cost = pl.CostEstimate(
        flops=2 * M * N * K,
        transcendentals=0,
        bytes_accessed=(M * K + N * K) * itemsize + N * b_itemsize
        + M * N * itemsize,
    )

    if resident:
        need = (2 * tm * Kp * itemsize + 2 * Np * Kp * itemsize
                + 2 * tm * tn * itemsize + 2 * tn * b_itemsize)
        vmem_limit = int(min(budget, max(need + (8 << 20), 32 << 20)))
        out = pl.pallas_call(
            _linear_resident_kernel,
            out_shape=jax.ShapeDtypeStruct((Mp, Np), dt),
            grid_spec=pltpu.PrefetchScalarGridSpec(
                num_scalar_prefetch=0,
                grid=(Mp // tm, Np // tn),
                in_specs=[
                    # activations: block index (i, 0) -> resident across inner N axis
                    pl.BlockSpec((tm, Kp), lambda i, j: (i, 0)),
                    # whole weight: constant block index -> DMA'd from HBM exactly once
                    pl.BlockSpec((Np, Kp), lambda i, j: (0, 0)),
                    pl.BlockSpec((1, tn), lambda i, j: (0, j)),
                ],
                out_specs=pl.BlockSpec((tm, tn), lambda i, j: (i, j)),
            ),
            compiler_params=pltpu.CompilerParams(
                dimension_semantics=("parallel", "parallel"),
                vmem_limit_bytes=vmem_limit,
            ),
            cost_estimate=cost,
        )(x2d, w2d, b2d)
    else:
        need = (2 * tm * tk * itemsize + 2 * tn * tk * itemsize
                + 2 * tm * tn * itemsize + 2 * tn * b_itemsize + tm * tn * 4)
        vmem_limit = int(min(budget, max(need + (8 << 20), 32 << 20)))
        out = pl.pallas_call(
            _linear_stream_kernel,
            out_shape=jax.ShapeDtypeStruct((Mp, Np), dt),
            grid_spec=pltpu.PrefetchScalarGridSpec(
                num_scalar_prefetch=0,
                grid=(Mp // tm, Np // tn, Kp // tk),   # K innermost (reduction)
                in_specs=[
                    pl.BlockSpec((tm, tk), lambda i, j, k: (i, k)),
                    # weight tile in native [N, K] layout: no HBM transpose
                    pl.BlockSpec((tn, tk), lambda i, j, k: (j, k)),
                    pl.BlockSpec((1, tn), lambda i, j, k: (0, j)),
                ],
                out_specs=pl.BlockSpec((tm, tn), lambda i, j, k: (i, j)),
                scratch_shapes=[pltpu.VMEM((tm, tn), jnp.float32)],
            ),
            compiler_params=pltpu.CompilerParams(
                dimension_semantics=("parallel", "parallel", "arbitrary"),
                vmem_limit_bytes=vmem_limit,
            ),
            cost_estimate=cost,
        )(x2d, w2d, b2d)

    if (Mp, Np) != (M, N):
        out = out[:M, :N]
    return out.reshape(*orig_shape[:-1], N)


def init_simple_linear_params(key, in_features, out_features, dtype=jnp.float32):
    """Matches torch kaiming_uniform_(a=sqrt(5)) for a 2-D weight:
    uniform(-1/sqrt(fan_in), 1/sqrt(fan_in)); bias initialized to zeros."""
    bound = 1.0 / math.sqrt(in_features)
    weight = jax.random.uniform(
        key, (out_features, in_features), dtype=dtype, minval=-bound, maxval=bound
    )
    bias = jnp.zeros((out_features,), dtype=dtype)
    return weight, bias


if __name__ == "__main__":
    key = jax.random.PRNGKey(0)
    kx, kw = jax.random.split(key)

    # Shapes that exercise the Pallas path (K, N >= 128).
    batch, seq, in_features, out_features = 2, 8, 256, 384
    x = jax.random.normal(kx, (batch, seq, in_features), dtype=jnp.float32)
    weight, bias = init_simple_linear_params(kw, in_features, out_features)
    y_ref = jnp.einsum("bsi,oi->bso", x, weight) + bias

    # 1) weight-resident Pallas path
    y = jax.block_until_ready(simple_linear(x, weight, bias))
    assert y.shape == (batch, seq, out_features)
    assert jnp.allclose(y, y_ref, atol=1e-3, rtol=1e-3)

    # 2) K-streaming Pallas path (forced)
    y_s = jax.block_until_ready(simple_linear(x, weight, bias, force_stream=True))
    assert jnp.allclose(y_s, y_ref, atol=1e-3, rtol=1e-3)

    # 3) tiny-shape XLA fallback path (e.g. hidden=32 layers)
    xs = jax.random.normal(kx, (2, 8, 32), dtype=jnp.float32)
    ws, bs = init_simple_linear_params(kw, 32, 32)
    y_t = jax.block_until_ready(simple_linear(xs, ws, bs))
    y_t_ref = jnp.einsum("bsi,oi->bso", xs, ws) + bs
    assert jnp.allclose(y_t, y_t_ref, atol=1e-5, rtol=1e-5)

    print("KERNEL_OK")
</pallas_src>

<mosaic_0001>
module attributes {stable_mosaic.version = 11 : i64} {
  func.func @_linear_resident_kernel(%arg0: i32, %arg1: i32, %arg2: memref<16x256xf32, #tpu.memory_space<vmem>>, %arg3: memref<384x256xf32, #tpu.memory_space<vmem>>, %arg4: memref<1x128xf32, #tpu.memory_space<vmem>>, %arg5: memref<16x128xf32, #tpu.memory_space<vmem>>) attributes {dimension_semantics = [#tpu.dimension_semantics<parallel>, #tpu.dimension_semantics<parallel>], iteration_bounds = array<i64: 1, 3>, scalar_prefetch = 0 : i64, scratch_operands = 0 : i64, tpu.core_type = #tpu.core_type<tc>, window_params = [{transform_indices = @transform_0, window_bounds = array<i64: 16, 256>}, {pipeline_mode = #tpu.pipeline_mode<synchronous>, transform_indices = @transform_1, window_bounds = array<i64: 384, 256>}, {transform_indices = @transform_2, window_bounds = array<i64: 1, 128>}, {transform_indices = @transform_3, window_bounds = array<i64: 16, 128>}]} {
    %c128_i32 = arith.constant 128 : i32
    %0 = arith.muli %arg1, %c128_i32 : i32
    %1 = tpu.assume_multiple %0, 128 : i32
    %2 = arith.index_cast %1 : i32 to index
    %c0 = arith.constant 0 : index
    %3 = vector.load %arg3[%2, %c0] : memref<384x256xf32, #tpu.memory_space<vmem>>, vector<128x256xf32>
    %c0_0 = arith.constant 0 : index
    %c0_1 = arith.constant 0 : index
    %4 = vector.load %arg2[%c0_0, %c0_1] : memref<16x256xf32, #tpu.memory_space<vmem>>, vector<16x256xf32>
    %cst = arith.constant dense<0.000000e+00> : vector<16x128xf32>
    %5 = tpu.matmul %4, %3, %cst {dimension_numbers = #tpu.dot_dimension_numbers<[1], [1], [0], [0], [0, 0, 1, 0], [], []>} : vector<16x256xf32>, vector<128x256xf32>, vector<16x128xf32> -> vector<16x128xf32>
    %c0_2 = arith.constant 0 : index
    %c0_3 = arith.constant 0 : index
    %6 = vector.load %arg4[%c0_2, %c0_3] : memref<1x128xf32, #tpu.memory_space<vmem>>, vector<1x128xf32>
    %7 = vector.broadcast %6 : vector<1x128xf32> to vector<16x128xf32>
    %8 = arith.addf %5, %7 : vector<16x128xf32>
    %c0_4 = arith.constant 0 : index
    %c0_5 = arith.constant 0 : index
    %9 = vector.load %arg5[%c0_4, %c0_5] : memref<16x128xf32, #tpu.memory_space<vmem>>, vector<16x128xf32>
    tpu.vector_store %arg5[%c0_4, %c0_5], %8 {strides = array<i32>} : memref<16x128xf32, #tpu.memory_space<vmem>>, vector<16x128xf32>,
    return
  }
  func.func @transform_0(%arg0: i32, %arg1: i32) -> (i32, i32) {
    %c0_i32 = arith.constant 0 : i32
    %c0_i32_0 = arith.constant 0 : i32
    return %arg0, %c0_i32 : i32, i32
  }
  func.func @transform_1(%arg0: i32, %arg1: i32) -> (i32, i32) {
    %c0_i32 = arith.constant 0 : i32
    %c0_i32_0 = arith.constant 0 : i32
    %c0_i32_1 = arith.constant 0 : i32
    return %c0_i32, %c0_i32_0 : i32, i32
  }
  func.func @transform_2(%arg0: i32, %arg1: i32) -> (i32, i32) {
    %c0_i32 = arith.constant 0 : i32
    %c0_i32_0 = arith.constant 0 : i32
    return %c0_i32, %arg1 : i32, i32
  }
  func.func @transform_3(%arg0: i32, %arg1: i32) -> (i32, i32) {
    %c0_i32 = arith.constant 0 : i32
    return %arg0, %arg1 : i32, i32
  }
}

</mosaic_0001>

<llo_original>
// kernel: tpu_custom_call.1
$region0: #{tpu_custom_call.1}
  #allocation0 [shape = 'u32[]', space=smem, size = 0x4, offset = 0x4, fixed_abs, tag = 'smem constant byte address 0x4 - core index']
  #allocation1 [shape = 'u32[144,128]{1,0:T(1,128)}', space=vmem, size = 0x12000, scoped, tag = 'internal scratch']
  %s0 = inlined_call_operand.hbm [shape: f32[16,256], index: 0, kind: input, shape index: {}]
  %s1 = inlined_call_operand.hbm [shape: f32[384,256], index: 1, kind: input, shape index: {}]
  %s2 = inlined_call_operand.vmem [shape: f32[1,384], index: 2, kind: input, shape index: {}]
  %s3 = inlined_call_operand.hbm [shape: f32[16,384], index: 3, kind: output, shape index: {}]
  %s4 = sld [smem:[#allocation0]]
  $region53: #{tpu_custom_call.1} parent=0
    _
  %s6 = ssub.s32 1, %s4
  %s7 = scalar_select 0, %s6, %s4
  $region1: #{tpu_custom_call.1} parent=0
    #allocation2 [shape = 'u8[16384]{0}', space=vmem, size = 0x4000, scoped, tag = 'input window, operand 0, single buffered']
    #allocation3 [shape = 's32[2]{0}', space=sflag, size = 0x8, scoped, tag = 'scoped memory for tpu_custom_call.1']
    #allocation4 [shape = 's32[2]{0}', space=sflag, size = 0x8, scoped, tag = 'scoped memory for tpu_custom_call.1']
    #allocation5 [shape = 'u8[393216]{0}', space=vmem, size = 0x60000, scoped, tag = 'input window, operand 1, single buffered']
    #allocation6 [shape = 's32[1]{0}', space=sflag, size = 0x4, scoped, tag = 'scoped memory for tpu_custom_call.1']
    #allocation7 [shape = 'u8[16384]{0}', space=vmem, size = 0x4000, scoped, tag = 'output window, operand 0']
    %8 = vsyncpa [#allocation3], 0
    %9 = vsyncpa [#allocation6], 0
    %10 = vsyncpa [#allocation4], 0
    %s11 = scalar_lea.sflag [#allocation4], 1
    %12 = vsyncpa %s11, 0
    loop: start=0, step=1, limit=5
    $region2: #{tpu_custom_call.1} parent=1 // loop_pre_header
      _
    $region3: #{tpu_custom_call.1} parent=1 // loop_header
      %s14 = sphi 0, %s18
      %p15 = scmp.ge.s32.totalorder %s14, 5
      %s21 = sphi 0, %s33
      %s22 = sphi 0, %s29
      %s23 = sphi 0, %s21
      %s24 = sphi 0, %s22
      %s25 = sphi 0, %s23
      %s26 = sphi 0, %s24
      %s36 = sphi 0, %s38
      %s39 = sphi 0, %s36
      %s40 = sphi 0, %s39
      %s56 = sphi 0, %s40
      %s60 = sphi 0, %s60
      %s62 = sphi 0, %s60
      %s63 = sphi 0, %s62
      %s77 = sphi 0, %s63
      %s83 = sphi 0, %s85
      %s86 = sphi 0, %s83
      %s87 = sphi 0, %s86
      %s103 = sphi 0, %s87
      %s111 = sphi 0, %s113
      %s114 = sphi 0, %s111
      %s115 = sphi 0, %s114
      %s131 = sphi 0, %s115
    $region4: #{tpu_custom_call.1} parent=1 // loop_header_branch
      %17 = sbr.rel (%p15) target = $region8
    $region5: #{tpu_custom_call.1} parent=1 // loop_body
      %s19 = ssub.s32 %s14, 1
      %s20 = ssub.s32 %s14, 2
      %s27 = sadd.s32 1, %s22
      %p28 = scmp.ge.s32.totalorder %s27, 3
      %s29 = scalar_select %p28, 0, %s27
      %s30 = sadd.s32 1, %s21
      %s31 = scalar_select %p28, %s30, %s21
      %p32 = scmp.ge.s32.totalorder %s31, 1
      %s33 = scalar_select %p32, 0, %s31
      %s34 = ssub.s32 %s21, %s33
      %p35 = scmp.eq.s32.totalorder %s34, 0
      %s37 = sadd.s32 %s36, 1
      %s38 = scalar_select %p35, %s36, %s37
      %p41 = pneg %p35
      %p42 = scmp.eq.s32.totalorder %s14, 2
      %p43 = por %p41, %p42
      %p44 = scmp.ne.s32.totalorder %s36, %s39
      %p45 = scmp.eq.s32.totalorder %s14, 0
      %p46 = por %p44, %p45
      %p47 = scmp.ne.s32.totalorder %s36, %s39
      %p48 = scmp.eq.s32.totalorder %s19, 2
      %p49 = por %p47, %p48
      %p50 = scmp.ne.s32.totalorder %s39, %s40
      %p51 = scmp.eq.s32.totalorder %s19, 0
      %p52 = por %p50, %p51
      %p53 = scmp.ne.s32.totalorder %s39, %s40
      %p54 = scmp.eq.s32.totalorder %s20, 2
      %p55 = por %p53, %p54
      %p57 = scmp.ne.s32.totalorder %s40, %s56
      %p58 = scmp.eq.s32.totalorder %s20, 0
      %p59 = por %p57, %p58
      %s61 = sadd.s32 %s60, 1
      %p64 = scmp.eq.s32.totalorder %s14, 2
      %p65 = scmp.ne.s32.totalorder %s60, %s62
      %p66 = scmp.eq.s32.totalorder %s14, 0
      %p67 = por %p65, %p66
      %p68 = scmp.ne.s32.totalorder %s60, %s62
      %p69 = scmp.eq.s32.totalorder %s19, 2
      %p70 = por %p68, %p69
      %p71 = scmp.ne.s32.totalorder %s62, %s63
      %p72 = scmp.eq.s32.totalorder %s19, 0
      %p73 = por %p71, %p72
      %p74 = scmp.ne.s32.totalorder %s62, %s63
      %p75 = scmp.eq.s32.totalorder %s20, 2
      %p76 = por %p74, %p75
      %p78 = scmp.ne.s32.totalorder %s63, %s77
      %p79 = scmp.eq.s32.totalorder %s20, 0
      %p80 = por %p78, %p79
      %s81 = ssub.s32 %s22, %s29
      %p82 = scmp.eq.s32.totalorder %s81, 0
      %s84 = sadd.s32 %s83, 1
      %s85 = scalar_select %p82, %s83, %s84
      %p88 = pneg %p82
      %p89 = scmp.eq.s32.totalorder %s14, 2
      %p90 = por %p88, %p89
      %p91 = scmp.ne.s32.totalorder %s83, %s86
      %p92 = scmp.eq.s32.totalorder %s14, 0
      %p93 = por %p91, %p92
      %p94 = scmp.ne.s32.totalorder %s83, %s86
      %p95 = scmp.eq.s32.totalorder %s19, 2
      %p96 = por %p94, %p95
      %p97 = scmp.ne.s32.totalorder %s86, %s87
      %p98 = scmp.eq.s32.totalorder %s19, 0
      %p99 = por %p97, %p98
      %p100 = scmp.ne.s32.totalorder %s86, %s87
      %p101 = scmp.eq.s32.totalorder %s20, 2
      %p102 = por %p100, %p101
      %p104 = scmp.ne.s32.totalorder %s87, %s103
      %p105 = scmp.eq.s32.totalorder %s20, 0
      %p106 = por %p104, %p105
      %s107 = ssub.s32 %s21, %s33
      %s108 = ssub.s32 %s22, %s29
      %s109 = sor.u32 %s107, %s108
      %p110 = scmp.eq.s32.totalorder %s109, 0
      %s112 = sadd.s32 %s111, 1
      %s113 = scalar_select %p110, %s111, %s112
      %p116 = pneg %p110
      %p117 = scmp.eq.s32.totalorder %s14, 2
      %p118 = por %p116, %p117
      %p119 = scmp.ne.s32.totalorder %s111, %s114
      %p120 = scmp.eq.s32.totalorder %s14, 0
      %p121 = por %p119, %p120
      %p122 = scmp.ne.s32.totalorder %s111, %s114
      %p123 = scmp.eq.s32.totalorder %s19, 2
      %p124 = por %p122, %p123
      %p125 = scmp.ne.s32.totalorder %s114, %s115
      %p126 = scmp.eq.s32.totalorder %s19, 0
      %p127 = por %p125, %p126
      %p128 = scmp.ne.s32.totalorder %s114, %s115
      %p129 = scmp.eq.s32.totalorder %s20, 2
      %p130 = por %p128, %p129
      %p132 = scmp.ne.s32.totalorder %s115, %s131
      %p133 = scmp.eq.s32.totalorder %s20, 0
      %p134 = por %p132, %p133
      %p135 = scmp.le.s32.totalorder 1, %s14
      %p136 = scmp.lt.s32.totalorder %s14, 4
      %p137 = pnand %p135, %p136
      %p138 = pneg %p137
      // Predicated region
      $region9: #{tpu_custom_call.1} parent=5 // pred_check
        _
      $region10: #{tpu_custom_call.1} parent=5 // pred_check_branch
        %140 = sbr.rel (%p137) target = $region12
      $region11: #{tpu_custom_call.1} parent=5 // pred_region
        %s141 = ssub.s32 %s14, 1
        // Predicated region
        $region13: #{tpu_custom_call.1} parent=11 // pred_check
          %p142 = pneg %p52
        $region14: #{tpu_custom_call.1} parent=11 // pred_check_branch
          %144 = sbr.rel (%p142) target = $region16
        $region15: #{tpu_custom_call.1} parent=11 // pred_region
          %s145 = smul.u32 2, %s23
          %s147 = ssub.s32 512, 512
          %148 = vsyncadd [#allocation3], %s147
          %s149 = smul.addr %s145, 2
          %s150 = smul.addr %s149, 128
          %s151 = scalar_lea.hbm %s0, %s150
          %s152 = sshll.u32 [#allocation2], 4
          %s153 = int_to_ptr.vmem [resolvable:$true] %s152
          %158 = dma.hbm_to_vmem [thread:$0]  %s151, 512, %s153, [#allocation3], 256, 256, 16
        $region16: #{tpu_custom_call.1} parent=11 // pred_fallthru
          _
        // Predicated region
        $region17: #{tpu_custom_call.1} parent=11 // pred_check
          %p159 = pneg %p73
        $region18: #{tpu_custom_call.1} parent=11 // pred_check_branch
          %161 = sbr.rel (%p159) target = $region20
        $region19: #{tpu_custom_call.1} parent=11 // pred_region
          %s163 = ssub.s32 12288, 12288
          %164 = vsyncadd [#allocation6], %s163
          %s165 = sshll.u32 [#allocation5], 4
          %s166 = int_to_ptr.vmem [resolvable:$true] %s165
          %171 = dma.hbm_to_vmem [thread:$0]  %s1, 12288, %s166, [#allocation6], 256, 256, 16
        $region20: #{tpu_custom_call.1} parent=11 // pred_fallthru
          _
      $region12: #{tpu_custom_call.1} parent=5 // pred_fallthru
        _
      %p172 = scmp.lt.s32.totalorder %s14, 3
      // Predicated region
      $region21: #{tpu_custom_call.1} parent=5 // pred_check
        %p173 = pneg %p172
      $region22: #{tpu_custom_call.1} parent=5 // pred_check_branch
        %175 = sbr.rel (%p173) target = $region24
      $region23: #{tpu_custom_call.1} parent=5 // pred_region
        // Predicated region
        $region25: #{tpu_custom_call.1} parent=23 // pred_check
          %p176 = pneg %p93
        $region26: #{tpu_custom_call.1} parent=23 // pred_check_branch
          %178 = sbr.rel (%p176) target = $region28
        $region27: #{tpu_custom_call.1} parent=23 // pred_region
          %p179 = scmp.lt.s32.totalorder %s22, 2
          %s180 = scalar_select %p179, %s22, 2
          %s181 = scalar_lea.vmem %s2, %s180
        $region28: #{tpu_custom_call.1} parent=23 // pred_fallthru
          _
      $region24: #{tpu_custom_call.1} parent=5 // pred_fallthru
        _
      %p182 = scmp.le.s32.totalorder 1, %s14
      %p183 = scmp.lt.s32.totalorder %s14, 4
      %p184 = pnand %p182, %p183
      %p185 = pneg %p184
      // Predicated region
      $region29: #{tpu_custom_call.1} parent=5 // pred_check
        _
      $region30: #{tpu_custom_call.1} parent=5 // pred_check_branch
        %187 = sbr.rel (%p184) target = $region32
      $region31: #{tpu_custom_call.1} parent=5 // pred_region
        %s188 = ssub.s32 %s14, 1
        // Predicated region
        $region33: #{tpu_custom_call.1} parent=31 // pred_check
          %p189 = pneg %p52
        $region34: #{tpu_custom_call.1} parent=31 // pred_check_branch
          %191 = sbr.rel (%p189) target = $region36
        $region35: #{tpu_custom_call.1} parent=31 // pred_region
          %192 = dma.done [#allocation3], 512
        $region36: #{tpu_custom_call.1} parent=31 // pred_fallthru
          _
        // Predicated region
        $region37: #{tpu_custom_call.1} parent=31 // pred_check
          %p193 = pneg %p73
        $region38: #{tpu_custom_call.1} parent=31 // pred_check_branch
          %195 = sbr.rel (%p193) target = $region40
        $region39: #{tpu_custom_call.1} parent=31 // pred_region
          %196 = dma.done [#allocation6], 12288
        $region40: #{tpu_custom_call.1} parent=31 // pred_fallthru
          _
        %p197 = pneg %p52
        %p198 = pneg %p49
        %p199 = pneg %p73
        %p200 = pneg %p70
        %p201 = scmp.lt.s32.totalorder %s24, 2
        %s202 = scalar_select %p201, %s24, 2
        %s203 = scalar_lea.vmem %s2, %s202
        %p204 = pneg %p99
        %p205 = pneg %p96
        %p206 = pneg %p127
        %p207 = pneg %p124
        %s208 = sand.u32 %s114, 1
        %s209 = scalar_lea.sflag [#allocation4], %s208
        %s210 = sand.u32 %s114, 1
        %s211 = smul.addr %s210, 16
        %s212 = scalar_lea.vmem [#allocation7], %s211
        %s213 = smul.u32 2, %s23
        %p214 = scmp.lt.s32.totalorder %s24, 2
        %s215 = scalar_select %p214, %s24, 2
        %s216 = scalar_lea.vmem %s2, %s215
        %s217 = smul.u32 2, %s23
        %s218 = smul.u32 %s24, 128
        %s219 = sshra.s32 %s218, 3
        %s220 = sand.u32 %s218, 7
        %s221 = smul.u32 %s219, 2
        %s222 = smul.addr %s221, 8
        %s223 = scalar_lea.vmem [#allocation5], %s222
        %v224 = vld [vmem:[%s223] sm:$0xff]
        %v225 = vld [vmem:[%s223 + $0x8] sm:$0xff]
        %v226 = vld [vmem:[%s223 + $0x10] sm:$0xff]
        %v227 = vld [vmem:[%s223 + $0x18] sm:$0xff]
        %v228 = vld [vmem:[%s223 + $0x20] sm:$0xff]
        %v229 = vld [vmem:[%s223 + $0x28] sm:$0xff]
        %v230 = vld [vmem:[%s223 + $0x30] sm:$0xff]
        %v231 = vld [vmem:[%s223 + $0x38] sm:$0xff]
        %v232 = vld [vmem:[%s223 + $0x40] sm:$0xff]
        %v233 = vld [vmem:[%s223 + $0x48] sm:$0xff]
        %v234 = vld [vmem:[%s223 + $0x50] sm:$0xff]
        %v235 = vld [vmem:[%s223 + $0x58] sm:$0xff]
        %v236 = vld [vmem:[%s223 + $0x60] sm:$0xff]
        %v237 = vld [vmem:[%s223 + $0x68] sm:$0xff]
        %v238 = vld [vmem:[%s223 + $0x70] sm:$0xff]
        %v239 = vld [vmem:[%s223 + $0x78] sm:$0xff]
        %v240 = vld [vmem:[%s223 + $0x80] sm:$0xff]
        %v241 = vld [vmem:[%s223 + $0x88] sm:$0xff]
        %v242 = vld [vmem:[%s223 + $0x90] sm:$0xff]
        %v243 = vld [vmem:[%s223 + $0x98] sm:$0xff]
        %v244 = vld [vmem:[%s223 + $0xa0] sm:$0xff]
        %v245 = vld [vmem:[%s223 + $0xa8] sm:$0xff]
        %v246 = vld [vmem:[%s223 + $0xb0] sm:$0xff]
        %v247 = vld [vmem:[%s223 + $0xb8] sm:$0xff]
        %v248 = vld [vmem:[%s223 + $0xc0] sm:$0xff]
        %v249 = vld [vmem:[%s223 + $0xc8] sm:$0xff]
        %v250 = vld [vmem:[%s223 + $0xd0] sm:$0xff]
        %v251 = vld [vmem:[%s223 + $0xd8] sm:$0xff]
        %v252 = vld [vmem:[%s223 + $0xe0] sm:$0xff]
        %v253 = vld [vmem:[%s223 + $0xe8] sm:$0xff]
        %v254 = vld [vmem:[%s223 + $0xf0] sm:$0xff]
        %v255 = vld [vmem:[%s223 + $0xf8] sm:$0xff]
        %v256 = vld [vmem:[#allocation2] sm:$0xff]
        %v257 = vld [vmem:[#allocation2 + $0x8] sm:$0xff]
        %v258 = vld [vmem:[#allocation2 + $0x10] sm:$0xff]
        %v259 = vld [vmem:[#allocation2 + $0x18] sm:$0xff]
        %v260 = vld [vmem:[%s216] sm:$0x1]
        %v262 = vlaneseq
        %v263 = vshrl.u32 %v262, 7
        %v264 = vsub.s32 0, %v263
        %v265 = vrot.slane %v260, %v264
        %267 = vmatprep.subr.mxu0 %v225
        %268 = vmatpush1.xpose.msra.mxu0 %v224
        %269 = vmatprep.subr.mxu0 %v227
        %270 = vmatpush1.xpose.msra.mxu0 %v226
        %271 = vmatprep.subr.mxu0 %v229
        %272 = vmatpush1.xpose.msra.mxu0 %v228
        %273 = vmatprep.subr.mxu0 %v231
        %274 = vmatpush1.xpose.msra.mxu0 %v230
        %275 = vmatprep.subr.mxu0 %v233
        %276 = vmatpush1.xpose.msra.mxu0 %v232
        %277 = vmatprep.subr.mxu0 %v235
        %278 = vmatpush1.xpose.msra.mxu0 %v234
        %279 = vmatprep.subr.mxu0 %v237
        %280 = vmatpush1.xpose.msra.mxu0 %v236
        %281 = vmatprep.subr.mxu0 %v239
        %282 = vmatpush1.xpose.msra.mxu0 %v238
        %283 = vmatprep.subr.mxu0 %v241
        %284 = vmatpush1.xpose.msra.mxu0 %v240
        %285 = vmatprep.subr.mxu0 %v243
        %286 = vmatpush1.xpose.msra.mxu0 %v242
        %287 = vmatprep.subr.mxu0 %v245
        %288 = vmatpush1.xpose.msra.mxu0 %v244
        %289 = vmatprep.subr.mxu0 %v247
        %290 = vmatpush1.xpose.msra.mxu0 %v246
        %291 = vmatprep.subr.mxu0 %v249
        %292 = vmatpush1.xpose.msra.mxu0 %v248
        %293 = vmatprep.subr.mxu0 %v251
        %294 = vmatpush1.xpose.msra.mxu0 %v250
        %295 = vmatprep.subr.mxu0 %v253
        %296 = vmatpush1.xpose.msra.mxu0 %v252
        %297 = vmatprep.subr.mxu0 %v255
        %298 = vmatpush1.xpose.msra.mxu0 %v254
        %299 = vmatprep.subr.mxu0 0.0
        %300 = vmatpush1.xpose.msra.mxu0 0.0
        %301 = vmatprep.subr.mxu0 0.0
        %302 = vmatpush1.xpose.msra.mxu0 0.0
        %303 = vmatprep.subr.mxu0 0.0
        %304 = vmatpush1.xpose.msra.mxu0 0.0
        %305 = vmatprep.subr.mxu0 0.0
        %306 = vmatpush1.xpose.msra.mxu0 0.0
        %307 = vmatprep.subr.mxu0 0.0
        %308 = vmatpush1.xpose.msra.mxu0 0.0
        %309 = vmatprep.subr.mxu0 0.0
        %310 = vmatpush1.xpose.msra.mxu0 0.0
        %311 = vmatprep.subr.mxu0 0.0
        %312 = vmatpush1.xpose.msra.mxu0 0.0
        %313 = vmatprep.subr.mxu0 0.0
        %314 = vmatpush1.xpose.msra.mxu0 0.0
        %315 = vmatprep.subr.mxu0 0.0
        %316 = vmatpush1.xpose.msra.mxu0 0.0
        %317 = vmatprep.subr.mxu0 0.0
        %318 = vmatpush1.xpose.msra.mxu0 0.0
        %319 = vmatprep.subr.mxu0 0.0
        %320 = vmatpush1.xpose.msra.mxu0 0.0
        %321 = vmatprep.subr.mxu0 0.0
        %322 = vmatpush1.xpose.msra.mxu0 0.0
        %323 = vmatprep.subr.mxu0 0.0
        %324 = vmatpush1.xpose.msra.mxu0 0.0
        %325 = vmatprep.subr.mxu0 0.0
        %326 = vmatpush1.xpose.msra.mxu0 0.0
        %327 = vmatprep.subr.mxu0 0.0
        %328 = vmatpush1.xpose.msra.mxu0 0.0
        %329 = vmatprep.subr.mxu0 0.0
        %330 = vmatpush1.xpose.msra.mxu0 0.0
        %331 = vmatprep.mubr.f32.mxu0 %v257
        %332 = vmatmul.mubr.f32.gmra.mrb[0].mxu0 %v256
        %v333 = vpop.f32.mrb[0].mxu0
        %v334 = vadd.f32 %v265, %v333
        %v335 = vpop.f32.mrb[0].mxu0
        %336 = vmatprep.mubr.f32.mxu0 %v259
        %337 = vmatmul.mubr.f32.gmra.mrb[0].mxu0 %v258
        %v338 = vpop.f32.mrb[0].mxu0
        %v339 = vadd.f32 %v265, %v338
        %v340 = vpop.f32.mrb[0].mxu0
        %341 = vdwg.mxu0
        %342 = vst [vmem:[%s212] sm:$0xff] %v334
        %343 = vst [vmem:[%s212 + $0x8] sm:$0xff] %v339
        %s344 = sand.u32 %s114, 1
        %s345 = scalar_lea.sflag [#allocation4], %s344
        %s346 = sand.u32 %s114, 1
        %s347 = smul.addr %s346, 16
        %s348 = scalar_lea.vmem [#allocation7], %s347
        // Predicated region
        $region41: #{tpu_custom_call.1} parent=31 // pred_check
          %p349 = pneg %p124
        $region42: #{tpu_custom_call.1} parent=31 // pred_check_branch
          %351 = sbr.rel (%p349) target = $region44
        $region43: #{tpu_custom_call.1} parent=31 // pred_region
          %s352 = smul.u32 2, %s23
          %s354 = ssub.s32 256, 256
          %355 = vsyncadd %s345, %s354
          %s356 = smul.addr %s352, 3
          %s357 = sadd.s32 %s24, %s356
          %s358 = smul.addr %s357, 128
          %s359 = scalar_lea.hbm %s3, %s358
          %s360 = sshll.u32 %s348, 4
          %s361 = int_to_ptr.vmem [resolvable:$true] %s360
          %366 = dma.vmem_to_hbm [thread:$0]  %s361, 256, %s359, %s345, 128, 384, 8
        $region44: #{tpu_custom_call.1} parent=31 // pred_fallthru
          _
      $region32: #{tpu_custom_call.1} parent=5 // pred_fallthru
        _
      %p367 = scmp.le.s32.totalorder 2, %s14
      // Predicated region
      $region45: #{tpu_custom_call.1} parent=5 // pred_check
        %p368 = pneg %p367
      $region46: #{tpu_custom_call.1} parent=5 // pred_check_branch
        %370 = sbr.rel (%p368) target = $region48
      $region47: #{tpu_custom_call.1} parent=5 // pred_region
        %s371 = ssub.s32 %s14, 2
        // Predicated region
        $region49: #{tpu_custom_call.1} parent=47 // pred_check
          %p372 = pneg %p130
        $region50: #{tpu_custom_call.1} parent=47 // pred_check_branch
          %374 = sbr.rel (%p372) target = $region52
        $region51: #{tpu_custom_call.1} parent=47 // pred_region
          %s375 = sand.u32 %s115, 1
          %s376 = scalar_lea.sflag [#allocation4], %s375
          %s377 = sand.u32 %s115, 1
          %s378 = smul.addr %s377, 16
          %s379 = scalar_lea.vmem [#allocation7], %s378
          %380 = dma.done %s376, 256
        $region52: #{tpu_custom_call.1} parent=47 // pred_fallthru
          _
      $region48: #{tpu_custom_call.1} parent=5 // pred_fallthru
        _
    $region6: #{tpu_custom_call.1} parent=1 // loop_footer
      %s18 = sadd.s32 1, %s14
    $region7: #{tpu_custom_call.1} parent=1 // loop_footer_branch
      %13 = sbr.rel target = $region3
    $region8: #{tpu_custom_call.1} parent=1 // loop_exit
      _
    %381 = vsyncpa [#allocation3], 1
    %s382 = scalar_lea.sflag [#allocation3], 1
    %383 = vsyncpa %s382, 1
    %384 = vsyncpa [#allocation6], 1
    %385 = vsyncpa [#allocation4], 1
    %s386 = scalar_lea.sflag [#allocation4], 1
    %387 = vsyncpa %s386, 1

</llo_original>
